<compile_context>
chip_gen: v6e
topology: v6e:2x2x1
jax: 0.10.0
libtpu: 0.0.40
codegen_flags: <defaults>
</compile_context>

<pallas_src>
import jax
import jax.numpy as jnp
from jax.experimental import pallas as pl
from jax.experimental.pallas import tpu as pltpu


def dense_part_kernel(x_ref, w1_ref, b1_ref, w2_ref, b2_ref, w3_ref, b3_ref,
                      o_ref):
    x = x_ref[...]                                             # (T, D) f32
    # Layer 1 on the MXU in "A @ B^T" form: (16, D) x (T, D) -> (16, T).
    # The result lands with the batch on lanes, so all downstream tensors and
    # the output block are lane-dense (no relayout / masked stores needed).
    h1t = jax.lax.dot_general(
        w1_ref[...], x, (((1,), (1,)), ((), ())),
        preferred_element_type=jnp.float32)                    # (16, T)
    h1t = jnp.maximum(h1t + b1_ref[...], 0.0)                  # relu(lin1)
    # TODO(synk): nn.Dropout(0.1) is identity in eval mode; training-mode
    # dropout would use pltpu.prng_seed + pltpu.stateful_bernoulli here.
    h2t = jnp.dot(w2_ref[...], h1t,
                  preferred_element_type=jnp.float32) + b2_ref[...]
    h2t = jnp.maximum(h2t, 0.0)                                # (6, T) relu
    # Layer 3 is a 6-way dot per row: keep it off the under-utilized MXU —
    # VPU multiply + XLU sublane reduce, result is already the lane-dense
    # (1, T) output block.
    o_ref[...] = (jnp.sum(h2t * w3_ref[...], axis=0, keepdims=True)
                  + b3_ref[...])                               # (1, T)


def _round_up(x, m):
    return (x + m - 1) // m * m


def _pick_tile_n(n, d, block_bytes=2 * 1024 * 1024, max_tile=16 * 1024):
    """Rows per grid step: ~block_bytes of x per block (Pallas double-buffers
    it), multiple of 256, capped so tiny batches don't over-pad.  At D = 32
    this gives 16384 rows (2 MiB block, 4 MiB double-buffered) — comfortably
    under the default scoped VMEM on v5e (16 MiB) and v6e/v7x (32 MiB)."""
    rows = max(256, min(max_tile, (block_bytes // (d * 4)) // 256 * 256))
    return min(rows, _round_up(n, 256))


def dense_part_forward(x, params, tile_n=None):
    """x: (N, field_size, embedding_size) float32 -> (N, 1) float32."""
    n = x.shape[0]
    x2d = x.reshape(n, -1).astype(jnp.float32)   # glue: flatten, plain JAX
    d = x2d.shape[1]
    w1, b1, w2, b2, w3, b3 = params              # W1 (16,D) b1 (16,1) W2 (6,16)
    h1, h2 = w1.shape[0], w2.shape[0]            # b2 (6,1) w3 (6,1) b3 (1,1)

    if tile_n is None:
        tile_n = _pick_tile_n(n, d)
    assert tile_n % 256 == 0, tile_n
    n_pad = _round_up(n, tile_n)
    if n_pad != n:                               # tail tile: pad with zeros
        x2d = jnp.pad(x2d, ((0, n_pad - n), (0, 0)))

    const = lambda i: (0, 0)                     # weights resident across grid
    out = pl.pallas_call(
        dense_part_kernel,
        out_shape=jax.ShapeDtypeStruct((1, n_pad), jnp.float32),
        grid=(n_pad // tile_n,),
        in_specs=[
            pl.BlockSpec((tile_n, d), lambda i: (i, 0)),   # x: streamed
            pl.BlockSpec((h1, d), const),                  # W1 (resident)
            pl.BlockSpec((h1, 1), const),                  # b1
            pl.BlockSpec((h2, h1), const),                 # W2
            pl.BlockSpec((h2, 1), const),                  # b2
            pl.BlockSpec((h2, 1), const),                  # w3 (column)
            pl.BlockSpec((1, 1), const),                   # b3
        ],
        out_specs=pl.BlockSpec((1, tile_n), lambda i: (0, i)),  # lane-dense
        compiler_params=pltpu.CompilerParams(
            dimension_semantics=("parallel",)),
        cost_estimate=pl.CostEstimate(
            flops=2 * n_pad * (d * h1 + h1 * h2 + h2),
            transcendentals=0,
            bytes_accessed=n_pad * d * 4 + n_pad * 4
                           + 4 * (h1 * d + h1 + h2 * h1 + 2 * h2 + 1)),
    )(x2d, w1, b1, w2, b2, w3, b3)
    return out[0, :n].reshape(n, 1)


def init_params(key, field_size, embedding_size):
    """Deterministic init mimicking nn.Linear. Weights stored in PyTorch
    (out, in) layout; biases as (out, 1) columns; lin3 weight as a (6, 1)
    column (transposed) for the in-kernel VPU reduce."""
    d = field_size * embedding_size
    ks = jax.random.split(key, 6)

    def lin_init(kw, kb, fan_in, fan_out):
        bound = 1.0 / (fan_in ** 0.5)
        w = jax.random.uniform(kw, (fan_out, fan_in), jnp.float32, -bound, bound)
        b = jax.random.uniform(kb, (fan_out, 1), jnp.float32, -bound, bound)
        return w, b

    w1, b1 = lin_init(ks[0], ks[1], d, 16)
    w2, b2 = lin_init(ks[2], ks[3], 16, 6)
    w3, b3 = lin_init(ks[4], ks[5], 6, 1)
    return (w1, b1, w2, b2, jnp.transpose(w3), b3)   # w3 stored as (6, 1)


def dense_part_ref(x, params):
    """Pure-JAX reference for correctness checking."""
    n = x.shape[0]
    x2d = x.reshape(n, -1)
    w1, b1, w2, b2, w3, b3 = params
    h1 = jnp.maximum(x2d @ w1.T + b1[:, 0], 0.0)
    h2 = jnp.maximum(h1 @ w2.T + b2[:, 0], 0.0)
    return h2 @ w3 + b3                           # (n, 6) @ (6, 1) + (1, 1)


if __name__ == "__main__":
    key = jax.random.PRNGKey(0)
    kx, kp, kx2 = jax.random.split(key, 3)
    field_size, embedding_size, batch = 4, 8, 8
    x = jax.random.normal(kx, (batch, field_size, embedding_size), jnp.float32)
    params = init_params(kp, field_size, embedding_size)

    out = jax.block_until_ready(dense_part_forward(x, params))
    ref = dense_part_ref(x, params)
    assert out.shape == (batch, 1), out.shape
    assert jnp.allclose(out, ref, atol=1e-5, rtol=1e-5)

    # Exercise the tiled path: N not a multiple of the tile -> multi-step grid
    # plus zero-padded tail tile.
    batch2 = 700
    x2 = jax.random.normal(kx2, (batch2, field_size, embedding_size),
                           jnp.float32)
    out2 = jax.block_until_ready(dense_part_forward(x2, params, tile_n=256))
    ref2 = dense_part_ref(x2, params)
    assert out2.shape == (batch2, 1), out2.shape
    assert jnp.allclose(out2, ref2, atol=1e-5, rtol=1e-5)

    print("KERNEL_OK")
</pallas_src>

<mosaic_0001>
module attributes {stable_mosaic.version = 11 : i64} {
  func.func @dense_part_kernel(%arg0: i32, %arg1: memref<256x32xf32, #tpu.memory_space<vmem>>, %arg2: memref<16x32xf32, #tpu.memory_space<vmem>>, %arg3: memref<16x1xf32, #tpu.memory_space<vmem>>, %arg4: memref<6x16xf32, #tpu.memory_space<vmem>>, %arg5: memref<6x1xf32, #tpu.memory_space<vmem>>, %arg6: memref<6x1xf32, #tpu.memory_space<vmem>>, %arg7: memref<1x1xf32, #tpu.memory_space<vmem>>, %arg8: memref<1x256xf32, #tpu.memory_space<vmem>>) attributes {dimension_semantics = [#tpu.dimension_semantics<parallel>], iteration_bounds = array<i64: 1>, scalar_prefetch = 0 : i64, scratch_operands = 0 : i64, tpu.core_type = #tpu.core_type<tc>, window_params = [{transform_indices = @transform_0, window_bounds = array<i64: 256, 32>}, {pipeline_mode = #tpu.pipeline_mode<synchronous>, transform_indices = @transform_1, window_bounds = array<i64: 16, 32>}, {pipeline_mode = #tpu.pipeline_mode<synchronous>, transform_indices = @transform_2, window_bounds = array<i64: 16, 1>}, {pipeline_mode = #tpu.pipeline_mode<synchronous>, transform_indices = @transform_3, window_bounds = array<i64: 6, 16>}, {pipeline_mode = #tpu.pipeline_mode<synchronous>, transform_indices = @transform_4, window_bounds = array<i64: 6, 1>}, {pipeline_mode = #tpu.pipeline_mode<synchronous>, transform_indices = @transform_5, window_bounds = array<i64: 6, 1>}, {pipeline_mode = #tpu.pipeline_mode<synchronous>, transform_indices = @transform_6, window_bounds = array<i64: 1, 1>}, {transform_indices = @transform_7, window_bounds = array<i64: 1, 256>}]} {
    %c0 = arith.constant 0 : index
    %c0_0 = arith.constant 0 : index
    %0 = vector.load %arg1[%c0, %c0_0] : memref<256x32xf32, #tpu.memory_space<vmem>>, vector<256x32xf32>
    %c0_1 = arith.constant 0 : index
    %c0_2 = arith.constant 0 : index
    %1 = vector.load %arg2[%c0_1, %c0_2] : memref<16x32xf32, #tpu.memory_space<vmem>>, vector<16x32xf32>
    %cst = arith.constant dense<0.000000e+00> : vector<16x256xf32>
    %2 = tpu.matmul %1, %0, %cst {dimension_numbers = #tpu.dot_dimension_numbers<[1], [1], [0], [0], [0, 0, 1, 0], [], []>} : vector<16x32xf32>, vector<256x32xf32>, vector<16x256xf32> -> vector<16x256xf32>
    %c0_3 = arith.constant 0 : index
    %c0_4 = arith.constant 0 : index
    %3 = vector.load %arg3[%c0_3, %c0_4] : memref<16x1xf32, #tpu.memory_space<vmem>>, vector<16x1xf32>
    %4 = vector.broadcast %3 : vector<16x1xf32> to vector<16x256xf32>
    %5 = arith.addf %2, %4 : vector<16x256xf32>
    %cst_5 = arith.constant 0.000000e+00 : f32
    %6 = vector.broadcast %cst_5 : f32 to vector<16x256xf32>
    %7 = arith.maximumf %5, %6 : vector<16x256xf32>
    %c0_6 = arith.constant 0 : index
    %c0_7 = arith.constant 0 : index
    %8 = vector.load %arg4[%c0_6, %c0_7] : memref<6x16xf32, #tpu.memory_space<vmem>>, vector<6x16xf32>
    %cst_8 = arith.constant dense<0.000000e+00> : vector<6x256xf32>
    %9 = tpu.matmul %8, %7, %cst_8 {dimension_numbers = #tpu.dot_dimension_numbers<[1], [0], [0], [1], [0, 0, 1, 1], [], []>} : vector<6x16xf32>, vector<16x256xf32>, vector<6x256xf32> -> vector<6x256xf32>
    %c0_9 = arith.constant 0 : index
    %c0_10 = arith.constant 0 : index
    %10 = vector.load %arg5[%c0_9, %c0_10] : memref<6x1xf32, #tpu.memory_space<vmem>>, vector<6x1xf32>
    %11 = vector.broadcast %10 : vector<6x1xf32> to vector<6x256xf32>
    %12 = arith.addf %9, %11 : vector<6x256xf32>
    %cst_11 = arith.constant 0.000000e+00 : f32
    %13 = vector.broadcast %cst_11 : f32 to vector<6x256xf32>
    %14 = arith.maximumf %12, %13 : vector<6x256xf32>
    %c0_12 = arith.constant 0 : index
    %c0_13 = arith.constant 0 : index
    %15 = vector.load %arg6[%c0_12, %c0_13] : memref<6x1xf32, #tpu.memory_space<vmem>>, vector<6x1xf32>
    %16 = vector.broadcast %15 : vector<6x1xf32> to vector<6x256xf32>
    %17 = arith.mulf %14, %16 : vector<6x256xf32>
    %cst_14 = arith.constant dense<0.000000e+00> : vector<256xf32>
    %18 = vector.multi_reduction <add>, %17, %cst_14 [0] : vector<6x256xf32> to vector<256xf32>
    %19 = vector.shape_cast %18 : vector<256xf32> to vector<1x256xf32>
    %c0_15 = arith.constant 0 : index
    %c0_16 = arith.constant 0 : index
    %20 = vector.load %arg7[%c0_15, %c0_16] : memref<1x1xf32, #tpu.memory_space<vmem>>, vector<1x1xf32>
    %21 = vector.broadcast %20 : vector<1x1xf32> to vector<1x256xf32>
    %22 = arith.addf %19, %21 : vector<1x256xf32>
    %c0_17 = arith.constant 0 : index
    %c0_18 = arith.constant 0 : index
    %23 = vector.load %arg8[%c0_17, %c0_18] : memref<1x256xf32, #tpu.memory_space<vmem>>, vector<1x256xf32>
    tpu.vector_store %arg8[%c0_17, %c0_18], %22 {strides = array<i32>} : memref<1x256xf32, #tpu.memory_space<vmem>>, vector<1x256xf32>,
    return
  }
  func.func @transform_0(%arg0: i32) -> (i32, i32) {
    %c0_i32 = arith.constant 0 : i32
    %c0_i32_0 = arith.constant 0 : i32
    return %arg0, %c0_i32 : i32, i32
  }
  func.func @transform_1(%arg0: i32) -> (i32, i32) {
    %c0_i32 = arith.constant 0 : i32
    %c0_i32_0 = arith.constant 0 : i32
    %c0_i32_1 = arith.constant 0 : i32
    return %c0_i32, %c0_i32_0 : i32, i32
  }
  func.func @transform_2(%arg0: i32) -> (i32, i32) {
    %c0_i32 = arith.constant 0 : i32
    %c0_i32_0 = arith.constant 0 : i32
    %c0_i32_1 = arith.constant 0 : i32
    return %c0_i32, %c0_i32_0 : i32, i32
  }
  func.func @transform_3(%arg0: i32) -> (i32, i32) {
    %c0_i32 = arith.constant 0 : i32
    %c0_i32_0 = arith.constant 0 : i32
    %c0_i32_1 = arith.constant 0 : i32
    return %c0_i32, %c0_i32_0 : i32, i32
  }
  func.func @transform_4(%arg0: i32) -> (i32, i32) {
    %c0_i32 = arith.constant 0 : i32
    %c0_i32_0 = arith.constant 0 : i32
    %c0_i32_1 = arith.constant 0 : i32
    return %c0_i32, %c0_i32_0 : i32, i32
  }
  func.func @transform_5(%arg0: i32) -> (i32, i32) {
    %c0_i32 = arith.constant 0 : i32
    %c0_i32_0 = arith.constant 0 : i32
    %c0_i32_1 = arith.constant 0 : i32
    return %c0_i32, %c0_i32_0 : i32, i32
  }
  func.func @transform_6(%arg0: i32) -> (i32, i32) {
    %c0_i32 = arith.constant 0 : i32
    %c0_i32_0 = arith.constant 0 : i32
    %c0_i32_1 = arith.constant 0 : i32
    return %c0_i32, %c0_i32_0 : i32, i32
  }
  func.func @transform_7(%arg0: i32) -> (i32, i32) {
    %c0_i32 = arith.constant 0 : i32
    %c0_i32_0 = arith.constant 0 : i32
    return %c0_i32, %arg0 : i32, i32
  }
}

</mosaic_0001>

<llo_original>
// kernel: tpu_custom_call.1
$region0: #{tpu_custom_call.1}
  #allocation0 [shape = 'u32[]', space=smem, size = 0x4, offset = 0x4, fixed_abs, tag = 'smem constant byte address 0x4 - core index']
  #allocation1 [shape = 'u32[144,128]{1,0:T(1,128)}', space=vmem, size = 0x12000, scoped, tag = 'internal scratch']
  #allocation2 [shape = 'f32[1,1]{1,0:T(1,128)S(1)}', space=vmem, size = 0x200, scoped, tag = 'scoped memory for tpu_custom_call.1']
  %s0 = inlined_call_operand.vmem [shape: f32[256,32], index: 0, kind: input, shape index: {}]
  %s1 = inlined_call_operand.vmem [shape: f32[16,32], index: 1, kind: input, shape index: {}]
  %s2 = inlined_call_operand.vmem [shape: f32[16,1], index: 2, kind: input, shape index: {}]
  %s3 = inlined_call_operand.vmem [shape: f32[6,16], index: 3, kind: input, shape index: {}]
  %s4 = inlined_call_operand.vmem [shape: f32[6,1], index: 4, kind: input, shape index: {}]
  %s5 = inlined_call_operand.vmem [shape: f32[6,1], index: 5, kind: input, shape index: {}]
  %s6 = inlined_call_operand.<no memory space> [shape: f32[1,1], index: 6, kind: input, shape index: {}]
  %s7 = inlined_call_operand.hbm [shape: f32[1,256], index: 7, kind: output, shape index: {}]
  %s8 = sld [smem:[#allocation0]]
  $region38: #{tpu_custom_call.1} parent=0
    _
  %s10 = ssub.s32 1, %s8
  %s11 = scalar_select 0, %s10, %s8
  %v12 = vstv %s6
  %13 = vst [vmem:[#allocation2] sm:$0x1] %v12
  $region1: #{tpu_custom_call.1} parent=0
    #allocation3 [shape = 'u8[1024]{0}', space=vmem, size = 0x400, scoped, tag = 'output window, operand 0, single buffered']
    #allocation4 [shape = 's32[1]{0}', space=sflag, size = 0x4, scoped, tag = 'scoped memory for tpu_custom_call.1']
    %14 = vsyncpa [#allocation4], 0
    // Predicated region
    $region2: #{tpu_custom_call.1} parent=1 // pred_check
      _
    $region3: #{tpu_custom_call.1} parent=1 // pred_check_branch
      %16 = sbr.rel (0) target = $region5
    $region4: #{tpu_custom_call.1} parent=1 // pred_region
      _
    $region5: #{tpu_custom_call.1} parent=1 // pred_fallthru
      _
    // Predicated region
    $region6: #{tpu_custom_call.1} parent=1 // pred_check
      _
    $region7: #{tpu_custom_call.1} parent=1 // pred_check_branch
      %18 = sbr.rel (0) target = $region9
    $region8: #{tpu_custom_call.1} parent=1 // pred_region
      _
    $region9: #{tpu_custom_call.1} parent=1 // pred_fallthru
      _
    // Predicated region
    $region10: #{tpu_custom_call.1} parent=1 // pred_check
      _
    $region11: #{tpu_custom_call.1} parent=1 // pred_check_branch
      %20 = sbr.rel (0) target = $region13
    $region12: #{tpu_custom_call.1} parent=1 // pred_region
      _
    $region13: #{tpu_custom_call.1} parent=1 // pred_fallthru
      _
    // Predicated region
    $region14: #{tpu_custom_call.1} parent=1 // pred_check
      _
    $region15: #{tpu_custom_call.1} parent=1 // pred_check_branch
      %22 = sbr.rel (0) target = $region17
    $region16: #{tpu_custom_call.1} parent=1 // pred_region
      _
    $region17: #{tpu_custom_call.1} parent=1 // pred_fallthru
      _
    // Predicated region
    $region18: #{tpu_custom_call.1} parent=1 // pred_check
      _
    $region19: #{tpu_custom_call.1} parent=1 // pred_check_branch
      %24 = sbr.rel (0) target = $region21
    $region20: #{tpu_custom_call.1} parent=1 // pred_region
      _
    $region21: #{tpu_custom_call.1} parent=1 // pred_fallthru
      _
    // Predicated region
    $region22: #{tpu_custom_call.1} parent=1 // pred_check
      _
    $region23: #{tpu_custom_call.1} parent=1 // pred_check_branch
      %26 = sbr.rel (0) target = $region25
    $region24: #{tpu_custom_call.1} parent=1 // pred_region
      _
    $region25: #{tpu_custom_call.1} parent=1 // pred_fallthru
      _
    // Predicated region
    $region26: #{tpu_custom_call.1} parent=1 // pred_check
      _
    $region27: #{tpu_custom_call.1} parent=1 // pred_check_branch
      %28 = sbr.rel (0) target = $region29
    $region28: #{tpu_custom_call.1} parent=1 // pred_region
      _
    $region29: #{tpu_custom_call.1} parent=1 // pred_fallthru
      _
    %v29 = vld [vmem:[%s0] sm:$0xff]
    %v30 = vld [vmem:[%s0 + $0x8] sm:$0xff]
    %v31 = vld [vmem:[%s0 + $0x10] sm:$0xff]
    %v32 = vld [vmem:[%s0 + $0x18] sm:$0xff]
    %v33 = vld [vmem:[%s0 + $0x20] sm:$0xff]
    %v34 = vld [vmem:[%s0 + $0x28] sm:$0xff]
    %v35 = vld [vmem:[%s0 + $0x30] sm:$0xff]
    %v36 = vld [vmem:[%s0 + $0x38] sm:$0xff]
    %v37 = vld [vmem:[%s0 + $0x40] sm:$0xff]
    %v38 = vld [vmem:[%s0 + $0x48] sm:$0xff]
    %v39 = vld [vmem:[%s0 + $0x50] sm:$0xff]
    %v40 = vld [vmem:[%s0 + $0x58] sm:$0xff]
    %v41 = vld [vmem:[%s0 + $0x60] sm:$0xff]
    %v42 = vld [vmem:[%s0 + $0x68] sm:$0xff]
    %v43 = vld [vmem:[%s0 + $0x70] sm:$0xff]
    %v44 = vld [vmem:[%s0 + $0x78] sm:$0xff]
    %v45 = vld [vmem:[%s0 + $0x80] sm:$0xff]
    %v46 = vld [vmem:[%s0 + $0x88] sm:$0xff]
    %v47 = vld [vmem:[%s0 + $0x90] sm:$0xff]
    %v48 = vld [vmem:[%s0 + $0x98] sm:$0xff]
    %v49 = vld [vmem:[%s0 + $0xa0] sm:$0xff]
    %v50 = vld [vmem:[%s0 + $0xa8] sm:$0xff]
    %v51 = vld [vmem:[%s0 + $0xb0] sm:$0xff]
    %v52 = vld [vmem:[%s0 + $0xb8] sm:$0xff]
    %v53 = vld [vmem:[%s0 + $0xc0] sm:$0xff]
    %v54 = vld [vmem:[%s0 + $0xc8] sm:$0xff]
    %v55 = vld [vmem:[%s0 + $0xd0] sm:$0xff]
    %v56 = vld [vmem:[%s0 + $0xd8] sm:$0xff]
    %v57 = vld [vmem:[%s0 + $0xe0] sm:$0xff]
    %v58 = vld [vmem:[%s0 + $0xe8] sm:$0xff]
    %v59 = vld [vmem:[%s0 + $0xf0] sm:$0xff]
    %v60 = vld [vmem:[%s0 + $0xf8] sm:$0xff]
    %v61 = vld [vmem:[%s1] sm:$0xff]
    %v62 = vld [vmem:[%s1 + $0x8] sm:$0xff]
    %v63 = vld [vmem:[%s2] sm:$0xff]
    %v64 = vld [vmem:[%s2 + $0x8] sm:$0xff]
    %66 = vset.pattern.permute.xlu0 0
    %67 = vperm.xlu0 %66, %v63
    %v68 = vpop.permute.xlu0 %67
    %71 = vset.pattern.permute.xlu0 0
    %72 = vperm.xlu0 %71, %v64
    %v73 = vpop.permute.xlu0 %72
    %vm75 = vcmask 261120
    %v77 = vsel %vm75, %v61, 0
    %v80 = vsel %vm75, %v62, 0
    %v83 = vsel %vm75, %v29, 0
    %v86 = vsel %vm75, %v30, 0
    %v89 = vsel %vm75, %v31, 0
    %v92 = vsel %vm75, %v32, 0
    %v95 = vsel %vm75, %v33, 0
    %v98 = vsel %vm75, %v34, 0
    %v101 = vsel %vm75, %v35, 0
    %v104 = vsel %vm75, %v36, 0
    %v107 = vsel %vm75, %v37, 0
    %v110 = vsel %vm75, %v38, 0
    %v113 = vsel %vm75, %v39, 0
    %v116 = vsel %vm75, %v40, 0
    %v119 = vsel %vm75, %v41, 0
    %v122 = vsel %vm75, %v42, 0
    %v125 = vsel %vm75, %v43, 0
    %v128 = vsel %vm75, %v44, 0
    %v131 = vsel %vm75, %v45, 0
    %v134 = vsel %vm75, %v46, 0
    %v137 = vsel %vm75, %v47, 0
    %v140 = vsel %vm75, %v48, 0
    %v143 = vsel %vm75, %v49, 0
    %v146 = vsel %vm75, %v50, 0
    %v149 = vsel %vm75, %v51, 0
    %v152 = vsel %vm75, %v52, 0
    %v155 = vsel %vm75, %v53, 0
    %v158 = vsel %vm75, %v54, 0
    %v161 = vsel %vm75, %v55, 0
    %v164 = vsel %vm75, %v56, 0
    %v167 = vsel %vm75, %v57, 0
    %v170 = vsel %vm75, %v58, 0
    %v173 = vsel %vm75, %v59, 0
    %v176 = vsel %vm75, %v60, 0
    %178 = vmatprep.subr.mxu0 0.0
    %179 = vmatpush1.xpose.msra.mxu0 %v128
    %180 = vmatprep.subr.mxu0 0.0
    %181 = vmatpush1.xpose.msra.mxu0 %v125
    %182 = vmatprep.subr.mxu0 0.0
    %183 = vmatpush1.xpose.msra.mxu0 %v122
    %184 = vmatprep.subr.mxu0 0.0
    %185 = vmatpush1.xpose.msra.mxu0 %v119
    %186 = vmatprep.subr.mxu0 0.0
    %187 = vmatpush1.xpose.msra.mxu0 %v116
    %188 = vmatprep.subr.mxu0 0.0
    %189 = vmatpush1.xpose.msra.mxu0 %v113
    %190 = vmatprep.subr.mxu0 0.0
    %191 = vmatpush1.xpose.msra.mxu0 %v110
    %192 = vmatprep.subr.mxu0 0.0
    %193 = vmatpush1.xpose.msra.mxu0 %v107
    %194 = vmatprep.subr.mxu0 0.0
    %195 = vmatpush1.xpose.msra.mxu0 %v104
    %196 = vmatprep.subr.mxu0 0.0
    %197 = vmatpush1.xpose.msra.mxu0 %v101
    %198 = vmatprep.subr.mxu0 0.0
    %199 = vmatpush1.xpose.msra.mxu0 %v98
    %200 = vmatprep.subr.mxu0 0.0
    %201 = vmatpush1.xpose.msra.mxu0 %v95
    %202 = vmatprep.subr.mxu0 0.0
    %203 = vmatpush1.xpose.msra.mxu0 %v92
    %204 = vmatprep.subr.mxu0 0.0
    %205 = vmatpush1.xpose.msra.mxu0 %v89
    %206 = vmatprep.subr.mxu0 0.0
    %207 = vmatpush1.xpose.msra.mxu0 %v86
    %208 = vmatprep.subr.mxu0 0.0
    %209 = vmatpush1.xpose.msra.mxu0 %v83
    %210 = vmatprep.subr.mxu0 0.0
    %211 = vmatpush2.xpose.msra.mxu0 %v176
    %212 = vmatprep.subr.mxu0 0.0
    %213 = vmatpush2.xpose.msra.mxu0 %v173
    %214 = vmatprep.subr.mxu0 0.0
    %215 = vmatpush2.xpose.msra.mxu0 %v170
    %216 = vmatprep.subr.mxu0 0.0
    %217 = vmatpush2.xpose.msra.mxu0 %v167
    %218 = vmatprep.subr.mxu0 0.0
    %219 = vmatpush2.xpose.msra.mxu0 %v164
    %220 = vmatprep.subr.mxu0 0.0
    %221 = vmatpush2.xpose.msra.mxu0 %v161
    %222 = vmatprep.subr.mxu0 0.0
    %223 = vmatpush2.xpose.msra.mxu0 %v158
    %224 = vmatprep.subr.mxu0 0.0
    %225 = vmatpush2.xpose.msra.mxu0 %v155
    %226 = vmatprep.subr.mxu0 0.0
    %227 = vmatpush2.xpose.msra.mxu0 %v152
    %228 = vmatprep.subr.mxu0 0.0
    %229 = vmatpush2.xpose.msra.mxu0 %v149
    %230 = vmatprep.subr.mxu0 0.0
    %231 = vmatpush2.xpose.msra.mxu0 %v146
    %232 = vmatprep.subr.mxu0 0.0
    %233 = vmatpush2.xpose.msra.mxu0 %v143
    %234 = vmatprep.subr.mxu0 0.0
    %235 = vmatpush2.xpose.msra.mxu0 %v140
    %236 = vmatprep.subr.mxu0 0.0
    %237 = vmatpush2.xpose.msra.mxu0 %v137
    %238 = vmatprep.subr.mxu0 0.0
    %239 = vmatpush2.xpose.msra.mxu0 %v134
    %240 = vmatprep.subr.mxu0 0.0
    %241 = vmatpush2.xpose.msra.mxu0 %v131
    %242 = vmatprep.mubr.f32.mxu0 0.0
    %243 = vmatmul.mubr.f32.gmra.mxu0 %v77
    %v244 = vpop.f32.mrf.mxu0
    %v245 = vadd.f32 %v68, %v244
    %v246 = vpop.f32.mrf.mxu0
    %v247 = vadd.f32 %v68, %v246
    %248 = vmatprep.mubr.f32.mxu0 0.0
    %249 = vmatmul.mubr.f32.gmra.mxu0 %v80
    %v250 = vpop.f32.mrf.mxu0
    %v251 = vadd.f32 %v73, %v250
    %v252 = vpop.f32.mrf.mxu0
    %v253 = vadd.f32 %v73, %v252
    %254 = vdwg.mxu0
    %v255 = vmax.f32 %v245, 0.0
    %v256 = vmax.f32 %v247, 0.0
    %v257 = vmax.f32 %v251, 0.0
    %v258 = vmax.f32 %v253, 0.0
    %v259 = vld [vmem:[%s3] sm:$0x3f]
    %v260 = vld [vmem:[%s4] sm:$0x3f]
    %262 = vset.pattern.permute.xlu0 0
    %263 = vperm.xlu0 %262, %v260
    %v264 = vpop.permute.xlu0 %263
    %vm266 = vcmask 130048
    %v268 = vsel %vm266, %v259, 0
    %270 = vmatprep.subr.mxu0 0.0
    %271 = vmatpush1.msra.mxu0 0.0
    %272 = vmatprep.subr.mxu0 0.0
    %273 = vmatpush1.msra.mxu0 0.0
    %274 = vmatprep.subr.mxu0 0.0
    %275 = vmatpush1.msra.mxu0 0.0
    %276 = vmatprep.subr.mxu0 0.0
    %277 = vmatpush1.msra.mxu0 0.0
    %278 = vmatprep.subr.mxu0 0.0
    %279 = vmatpush1.msra.mxu0 0.0
    %280 = vmatprep.subr.mxu0 0.0
    %281 = vmatpush1.msra.mxu0 0.0
    %282 = vmatprep.subr.mxu0 0.0
    %283 = vmatpush1.msra.mxu0 0.0
    %284 = vmatprep.subr.mxu0 0.0
    %285 = vmatpush1.msra.mxu0 0.0
    %286 = vmatprep.subr.mxu0 0.0
    %287 = vmatpush1.msra.mxu0 0.0
    %288 = vmatprep.subr.mxu0 0.0
    %289 = vmatpush1.msra.mxu0 0.0
    %290 = vmatprep.subr.mxu0 0.0
    %291 = vmatpush1.msra.mxu0 0.0
    %292 = vmatprep.subr.mxu0 0.0
    %293 = vmatpush1.msra.mxu0 0.0
    %294 = vmatprep.subr.mxu0 0.0
    %295 = vmatpush1.msra.mxu0 0.0
    %296 = vmatprep.subr.mxu0 0.0
    %297 = vmatpush1.msra.mxu0 0.0
    %298 = vmatprep.subr.mxu0 %v258
    %299 = vmatpush1.msra.mxu0 %v257
    %300 = vmatprep.subr.mxu0 %v256
    %301 = vmatpush1.msra.mxu0 %v255
    %302 = vmatprep.subr.mxu0 0.0
    %303 = vmatpush2.msra.mxu0 0.0
    %304 = vmatprep.subr.mxu0 0.0
    %305 = vmatpush2.msra.mxu0 0.0
    %306 = vmatprep.subr.mxu0 0.0
    %307 = vmatpush2.msra.mxu0 0.0
    %308 = vmatprep.subr.mxu0 0.0
    %309 = vmatpush2.msra.mxu0 0.0
    %310 = vmatprep.subr.mxu0 0.0
    %311 = vmatpush2.msra.mxu0 0.0
    %312 = vmatprep.subr.mxu0 0.0
    %313 = vmatpush2.msra.mxu0 0.0
    %314 = vmatprep.subr.mxu0 0.0
    %315 = vmatpush2.msra.mxu0 0.0
    %316 = vmatprep.subr.mxu0 0.0
    %317 = vmatpush2.msra.mxu0 0.0
    %318 = vmatprep.subr.mxu0 0.0
    %319 = vmatpush2.msra.mxu0 0.0
    %320 = vmatprep.subr.mxu0 0.0
    %321 = vmatpush2.msra.mxu0 0.0
    %322 = vmatprep.subr.mxu0 0.0
    %323 = vmatpush2.msra.mxu0 0.0
    %324 = vmatprep.subr.mxu0 0.0
    %325 = vmatpush2.msra.mxu0 0.0
    %326 = vmatprep.subr.mxu0 0.0
    %327 = vmatpush2.msra.mxu0 0.0
    %328 = vmatprep.subr.mxu0 0.0
    %329 = vmatpush2.msra.mxu0 0.0
    %330 = vmatprep.subr.mxu0 0.0
    %331 = vmatpush2.msra.mxu0 0.0
    %332 = vmatprep.subr.mxu0 0.0
    %333 = vmatpush2.msra.mxu0 0.0
    %334 = vmatprep.mubr.f32.mxu0 0.0
    %335 = vmatmul.mubr.f32.gmra.mxu0 %v268
    %v336 = vpop.f32.mrf.mxu0
    %v337 = vadd.f32 %v264, %v336
    %v338 = vpop.f32.mrf.mxu0
    %v339 = vadd.f32 %v264, %v338
    %340 = vdwg.mxu0
    %v341 = vmax.f32 %v337, 0.0
    %v342 = vmax.f32 %v339, 0.0
    %v343 = vld [vmem:[%s5] sm:$0x3f]
    %345 = vset.pattern.permute.xlu0 0
    %346 = vperm.xlu0 %345, %v343
    %v347 = vpop.permute.xlu0 %346
    %v349 = vmul.f32 %v341, %v347
    %v350 = vmul.f32 %v342, %v347
    %vm351 = vcmask 1045504
    %v352 = vsel %vm351, %v349, 0.0
    %v353 = vrot.slane %v352, 4
    %v354 = vadd.f32 %v352, %v353
    %v355 = vrot.slane %v354, 2
    %v356 = vadd.f32 %v354, %v355
    %v357 = vrot.slane %v356, 1
    %v358 = vadd.f32 %v356, %v357
    %v359 = vsel %vm351, %v350, 0.0
    %v360 = vrot.slane %v359, 4
    %v361 = vadd.f32 %v359, %v360
    %v362 = vrot.slane %v361, 2
    %v363 = vadd.f32 %v361, %v362
    %v364 = vrot.slane %v363, 1
    %v365 = vadd.f32 %v363, %v364
    %v366 = vld [vmem:[#allocation2] sm:$0x1]
    %368 = vset.pattern.permute.xlu0 0
    %369 = vperm.xlu0 %368, %v366
    %v370 = vpop.permute.xlu0 %369
    %v372 = vlaneseq
    %v373 = vshrl.u32 %v372, 7
    %v374 = vsub.s32 0, %v373
    %v375 = vrot.slane %v370, %v374
    %v376 = vadd.f32 %v358, %v375
    %v377 = vadd.f32 %v365, %v375
    %v380 = vcombine.low %v376, %v377
    %v382 = vunpack.c.l.s4 1966171168
    %v383 = vunpack.c.0.s8 %v382
    %v384 = vlaneseq
    %v385 = vshrl.u32 %v384, 7
    %v386 = vsub.s32 %v383, %v385
    %v387 = vrot.slane %v380, %v386
    %v389 = vunpack.c.l.s4 1966171168
    %v390 = vunpack.c.0.s8 %v389
    %v391 = vlaneseq
    %v392 = vshrl.u32 %v391, 7
    %v393 = vsub.s32 %v390, %v392
    %v394 = vrot.slane %v387, %v393
    %v396 = vlaneseq
    %vm397 = vcmp.ge.s32.totalorder %v396, 0
    %vm398 = vcmp.lt.s32.totalorder %v396, 256
    %vm399 = vmand %vm397, %vm398
    %400 = vst.msk [vmem:[#allocation3] sm:$0x3] %vm399, %v394
    // Predicated region
    $region30: #{tpu_custom_call.1} parent=1 // pred_check
      _
    $region31: #{tpu_custom_call.1} parent=1 // pred_check_branch
      %402 = sbr.rel (0) target = $region33
    $region32: #{tpu_custom_call.1} parent=1 // pred_region
      %s404 = ssub.s32 32, 32
      %405 = vsyncadd [#allocation4], %s404
      %s407 = sshll.u32 [#allocation3], 4
      %s408 = int_to_ptr.vmem [resolvable:$true] %s407
      %410 = dma.vmem_to_hbm [thread:$0]  %s408, 32, %s7, [#allocation4]
    $region33: #{tpu_custom_call.1} parent=1 // pred_fallthru
      _
    // Predicated region
    $region34: #{tpu_custom_call.1} parent=1 // pred_check
      _
    $region35: #{tpu_custom_call.1} parent=1 // pred_check_branch
      %412 = sbr.rel (0) target = $region37
    $region36: #{tpu_custom_call.1} parent=1 // pred_region
      %413 = dma.done [#allocation4], 32
    $region37: #{tpu_custom_call.1} parent=1 // pred_fallthru
      _
    %414 = vsyncpa [#allocation4], 1

</llo_original>
